<compile_context>
chip_gen: v7x
topology: tpu7x:2x2x1
jax: 0.10.0
libtpu: 0.0.40
codegen_flags: <defaults>
</compile_context>

<pallas_src>
import functools

import jax
import jax.numpy as jnp
from jax.experimental import pallas as pl
from jax.experimental.pallas import tpu as pltpu


# ---------------------------------------------------------------------------
# Kernel
# ---------------------------------------------------------------------------
def _expand_kernel(a_ref, b_ref, x_ref, o_ref, *, nb):
    """One (batch-tile, row-tile) grid step.

    a_ref: (T_hs, H)      bf16       row band of the row dilation/upsample matrix
    b_ref: (W,  Ws)       bf16       column dilation/upsample matrix
    x_ref: (Nb, H, W)     bool/int8  input masks (0/1)
    o_ref: (Nb, T_hs, Ws) bool/int8  output masks (0/1)
    """
    a = a_ref[...]
    b = b_ref[...]
    for i in range(nb):  # static unroll; Nb is small and known at trace time
        x = x_ref[i].astype(jnp.bfloat16)                          # (H, W)
        tmp = jnp.dot(a, x, preferred_element_type=jnp.float32)    # (T_hs, W)
        acc = jnp.dot(tmp.astype(jnp.bfloat16), b,
                      preferred_element_type=jnp.float32)          # (T_hs, Ws)
        # Sums are small exact integers -> same ">0.5" threshold as the conv.
        o_ref[i] = (acc > 0.5).astype(o_ref.dtype)


# ---------------------------------------------------------------------------
# Wrapper helpers
# ---------------------------------------------------------------------------
def _band_matrices(h, w, stride, padding):
    """A[y,i] = [|y - i*s| <= p], B[j,x] = [|x - j*s| <= p] as bf16 0/1."""
    hs, ws = h * stride, w * stride
    y = jnp.arange(hs, dtype=jnp.int32)[:, None]
    i = jnp.arange(h, dtype=jnp.int32)[None, :]
    a = (jnp.abs(y - i * stride) <= padding).astype(jnp.bfloat16)   # (Hs, H)
    j = jnp.arange(w, dtype=jnp.int32)[:, None]
    xo = jnp.arange(ws, dtype=jnp.int32)[None, :]
    b = (jnp.abs(xo - j * stride) <= padding).astype(jnp.bfloat16)  # (W, Ws)
    return a, b


def _choose_tiles(n, h, w, hs, ws):
    """Pick (images per step, output-row tile) under a conservative VMEM budget."""
    # Bound the per-image f32 accumulator so tmp/acc stay small even for large
    # feature maps (v7x has only 64 MiB physical VMEM, 32 MiB default scoped).
    acc_budget = 2 << 20                                   # ~2 MiB f32 acc
    if hs * ws * 4 <= acc_budget:
        t_hs = hs
    else:
        t_hs = max(8, (acc_budget // (ws * 4)) // 8 * 8)   # multiple of 8
        t_hs = min(t_hs, hs)
    # Rough per-image bytes per step: double-buffered i8 in/out + f32 tmp/acc
    # + bf16 copies. Keep the whole step well under ~8 MiB.
    per_img = 2 * (h * w + t_hs * ws) + 6 * t_hs * (w + ws)
    nb = int(max(1, min(n, 16, (8 << 20) // max(per_img, 1))))
    return nb, t_hs


def _expand_call(x3, *, stride, padding, io_dtype):
    """Run the fused kernel on a (N, H, W) mask; returns (N, Hs, Ws)."""
    n, h, w = x3.shape
    hs, ws = h * stride, w * stride
    nb, t_hs = _choose_tiles(n, h, w, hs, ws)
    a_mat, b_mat = _band_matrices(h, w, stride, padding)

    grid = (pl.cdiv(n, nb), pl.cdiv(hs, t_hs))
    return pl.pallas_call(
        functools.partial(_expand_kernel, nb=nb),
        out_shape=jax.ShapeDtypeStruct((n, hs, ws), io_dtype),
        grid=grid,
        in_specs=[
            pl.BlockSpec((t_hs, h), lambda bi, ri: (ri, 0)),     # A row band
            pl.BlockSpec((w, ws), lambda bi, ri: (0, 0)),        # B, resident
            pl.BlockSpec((nb, h, w), lambda bi, ri: (bi, 0, 0)),  # input masks
        ],
        out_specs=pl.BlockSpec((nb, t_hs, ws), lambda bi, ri: (bi, ri, 0)),
        compiler_params=pltpu.CompilerParams(
            dimension_semantics=("parallel", "parallel"),
            vmem_limit_bytes=32 * 1024 * 1024,
        ),
    )(a_mat, b_mat, x3)


@functools.lru_cache(maxsize=None)
def _bool_io_supported():
    """Probe once whether Mosaic lowers bool kernel inputs/outputs cleanly."""
    try:
        x = jnp.zeros((1, 8, 128), jnp.bool_)
        jax.block_until_ready(
            _expand_call(x, stride=1, padding=1, io_dtype=jnp.bool_))
        return True
    except Exception:
        return False


def expand_mask(x, *, stride, padding=1):
    """Pallas implementation of ExpandMask.forward.

    x: bool array of shape (N, 1, H, W)
    returns: bool array of shape (N, 1, H*stride, W*stride)
    """
    assert x.shape[1] == 1, "ExpandMask requires a single channel"
    assert stride >= 1 and padding >= 0
    # bf16 intermediate is exact while the per-row band population <= 256.
    assert 2 * padding + 1 <= 256

    io_dtype = jnp.bool_ if _bool_io_supported() else jnp.int8
    x3 = x[:, 0]
    if x3.dtype != io_dtype:
        x3 = x3.astype(io_dtype)          # tiny: N*H*W bytes (input side only)

    out = _expand_call(x3, stride=stride, padding=padding, io_dtype=io_dtype)
    if out.dtype != jnp.bool_:
        # TODO(synk): dead path once Mosaic bool I/O is available everywhere;
        # this extra elementwise pass re-touches the full output in HBM.
        out = out.astype(jnp.bool_)
    return out[:, None, :, :]


# ---------------------------------------------------------------------------
# Pure-JAX reference mirroring the PyTorch forward (for correctness checks).
# ---------------------------------------------------------------------------
def _upsample_topleft(x, stride):
    """conv_transpose2d with pad_kernel (1 at [0,0]) == zero-insert upsample."""
    n, h, w = x.shape
    out = jnp.zeros((n, h, stride, w, stride), x.dtype)
    out = out.at[:, :, 0, :, 0].set(x)
    return out.reshape(n, h * stride, w * stride)


def _reference(x, *, stride, padding=1):
    xf = x[:, 0].astype(jnp.float32)
    if stride > 1:
        xf = _upsample_topleft(xf, stride)
    k = 1 + 2 * padding
    xpad = jnp.pad(xf, ((0, 0), (padding, padding), (padding, padding)))
    n, hs, ws = xf.shape
    acc = jnp.zeros((n, hs, ws), jnp.float32)
    for di in range(k):
        for dj in range(k):
            acc = acc + xpad[:, di:di + hs, dj:dj + ws]
    return (acc > 0.5)[:, None, :, :]


if __name__ == "__main__":
    key = jax.random.PRNGKey(0)
    N, C, H, W = 2, 1, 16, 16

    x = jax.random.bernoulli(key, p=0.25, shape=(N, C, H, W))  # bool NCHW

    # stride > 1 path (zero-insert upsample + dilate).
    out = jax.block_until_ready(expand_mask(x, stride=2, padding=1))
    ref = _reference(x, stride=2, padding=1)
    assert out.shape == (N, 1, 2 * H, 2 * W)
    assert out.dtype == jnp.bool_
    assert bool(jnp.array_equal(out, ref))

    # stride == 1 path (pure dilation, no upsample).
    out1 = jax.block_until_ready(expand_mask(x, stride=1, padding=1))
    ref1 = _reference(x, stride=1, padding=1)
    assert out1.shape == (N, 1, H, W)
    assert out1.dtype == jnp.bool_
    assert bool(jnp.array_equal(out1, ref1))

    # wider dilation window with a larger stride.
    out2 = jax.block_until_ready(expand_mask(x, stride=3, padding=2))
    ref2 = _reference(x, stride=3, padding=2)
    assert out2.shape == (N, 1, 3 * H, 3 * W)
    assert bool(jnp.array_equal(out2, ref2))

    print("KERNEL_OK")
</pallas_src>

<mosaic_0001>
module attributes {stable_mosaic.version = 11 : i64} {
  func.func @_expand_kernel(%arg0: i32, %arg1: i32, %arg2: memref<8x8xbf16, #tpu.memory_space<vmem>>, %arg3: memref<128x128xbf16, #tpu.memory_space<vmem>>, %arg4: memref<1x8x128xi32, #tpu.memory_space<vmem>>, %arg5: memref<1x8x128xi32, #tpu.memory_space<vmem>>) attributes {dimension_semantics = [#tpu.dimension_semantics<parallel>, #tpu.dimension_semantics<parallel>], iteration_bounds = array<i64: 1, 1>, scalar_prefetch = 0 : i64, scratch_operands = 0 : i64, tpu.core_type = #tpu.core_type<tc>, window_params = [{transform_indices = @transform_0, window_bounds = array<i64: 8, 8>}, {pipeline_mode = #tpu.pipeline_mode<synchronous>, transform_indices = @transform_1, window_bounds = array<i64: 128, 128>}, {transform_indices = @transform_2, window_bounds = array<i64: 1, 8, 128>}, {transform_indices = @transform_3, window_bounds = array<i64: 1, 8, 128>}]} {
    %c0 = arith.constant 0 : index
    %c0_0 = arith.constant 0 : index
    %0 = vector.load %arg2[%c0, %c0_0] : memref<8x8xbf16, #tpu.memory_space<vmem>>, vector<8x8xbf16>
    %c0_1 = arith.constant 0 : index
    %c0_2 = arith.constant 0 : index
    %1 = vector.load %arg3[%c0_1, %c0_2] : memref<128x128xbf16, #tpu.memory_space<vmem>>, vector<128x128xbf16>
    %c0_3 = arith.constant 0 : index
    %c0_4 = arith.constant 0 : index
    %c0_5 = arith.constant 0 : index
    %2 = vector.load %arg4[%c0_3, %c0_4, %c0_5] : memref<1x8x128xi32, #tpu.memory_space<vmem>>, vector<1x8x128xi32>
    %3 = vector.shape_cast %2 : vector<1x8x128xi32> to vector<8x128xi32>
    %cst = arith.constant dense<0> : vector<8x128xi32>
    %4 = arith.cmpi ne, %3, %cst : vector<8x128xi32>
    %5 = arith.extui %4 : vector<8x128xi1> to vector<8x128xi32>
    %6 = arith.sitofp %5 : vector<8x128xi32> to vector<8x128xf32>
    %7 = arith.truncf %6 : vector<8x128xf32> to vector<8x128xbf16>
    %cst_6 = arith.constant dense<0.000000e+00> : vector<8x128xf32>
    %8 = tpu.matmul %0, %7, %cst_6 {dimension_numbers = #tpu.dot_dimension_numbers<[1], [0], [0], [1], [0, 0, 1, 1], [], []>} : vector<8x8xbf16>, vector<8x128xbf16>, vector<8x128xf32> -> vector<8x128xf32>
    %9 = arith.truncf %8 : vector<8x128xf32> to vector<8x128xbf16>
    %cst_7 = arith.constant dense<0.000000e+00> : vector<8x128xf32>
    %10 = tpu.matmul %9, %1, %cst_7 {dimension_numbers = #tpu.dot_dimension_numbers<[1], [0], [0], [1], [0, 0, 1, 1], [], []>} : vector<8x128xbf16>, vector<128x128xbf16>, vector<8x128xf32> -> vector<8x128xf32>
    %cst_8 = arith.constant 5.000000e-01 : f32
    %11 = vector.broadcast %cst_8 : f32 to vector<8x128xf32>
    %12 = arith.cmpf ogt, %10, %11 : vector<8x128xf32>
    %c0_9 = arith.constant 0 : index
    %c0_10 = arith.constant 0 : index
    %c0_11 = arith.constant 0 : index
    %13 = vector.load %arg5[%c0_9, %c0_10, %c0_11] : memref<1x8x128xi32, #tpu.memory_space<vmem>>, vector<1x8x128xi32>
    %14 = arith.extui %12 : vector<8x128xi1> to vector<8x128xi32>
    %15 = vector.shape_cast %13 : vector<1x8x128xi32> to vector<8x128xi32>
    %16 = vector.shape_cast %14 : vector<8x128xi32> to vector<1x8x128xi32>
    %cst_12 = arith.constant dense<0> : vector<8x128xi32>
    %17 = arith.cmpi ne, %15, %cst_12 : vector<8x128xi32>
    tpu.vector_store %arg5[%c0_9, %c0_10, %c0_11], %16 {strides = array<i32>} : memref<1x8x128xi32, #tpu.memory_space<vmem>>, vector<1x8x128xi32>,
    return
  }
  func.func @transform_0(%arg0: i32, %arg1: i32) -> (i32, i32) {
    %c0_i32 = arith.constant 0 : i32
    %c0_i32_0 = arith.constant 0 : i32
    return %arg1, %c0_i32 : i32, i32
  }
  func.func @transform_1(%arg0: i32, %arg1: i32) -> (i32, i32) {
    %c0_i32 = arith.constant 0 : i32
    %c0_i32_0 = arith.constant 0 : i32
    %c0_i32_1 = arith.constant 0 : i32
    return %c0_i32, %c0_i32_0 : i32, i32
  }
  func.func @transform_2(%arg0: i32, %arg1: i32) -> (i32, i32, i32) {
    %c0_i32 = arith.constant 0 : i32
    %c0_i32_0 = arith.constant 0 : i32
    %c0_i32_1 = arith.constant 0 : i32
    return %arg0, %c0_i32, %c0_i32_0 : i32, i32, i32
  }
  func.func @transform_3(%arg0: i32, %arg1: i32) -> (i32, i32, i32) {
    %c0_i32 = arith.constant 0 : i32
    %c0_i32_0 = arith.constant 0 : i32
    return %arg0, %arg1, %c0_i32 : i32, i32, i32
  }
}

module attributes {stable_mosaic.version = 11 : i64} {
  func.func @_expand_kernel(%arg0: i32, %arg1: i32, %arg2: memref<32x16xbf16, #tpu.memory_space<vmem>>, %arg3: memref<16x32xbf16, #tpu.memory_space<vmem>>, %arg4: memref<2x16x16xi8, #tpu.memory_space<vmem>>, %arg5: memref<2x32x32xi8, #tpu.memory_space<vmem>>) attributes {dimension_semantics = [#tpu.dimension_semantics<parallel>, #tpu.dimension_semantics<parallel>], iteration_bounds = array<i64: 1, 1>, scalar_prefetch = 0 : i64, scratch_operands = 0 : i64, tpu.core_type = #tpu.core_type<tc>, window_params = [{transform_indices = @transform_0, window_bounds = array<i64: 32, 16>}, {pipeline_mode = #tpu.pipeline_mode<synchronous>, transform_indices = @transform_1, window_bounds = array<i64: 16, 32>}, {transform_indices = @transform_2, window_bounds = array<i64: 2, 16, 16>}, {transform_indices = @transform_3, window_bounds = array<i64: 2, 32, 32>}]} {
    %c0 = arith.constant 0 : index
    %c0_0 = arith.constant 0 : index
    %0 = vector.load %arg2[%c0, %c0_0] : memref<32x16xbf16, #tpu.memory_space<vmem>>, vector<32x16xbf16>
    %c0_1 = arith.constant 0 : index
    %c0_2 = arith.constant 0 : index
    %1 = vector.load %arg3[%c0_1, %c0_2] : memref<16x32xbf16, #tpu.memory_space<vmem>>, vector<16x32xbf16>
    %c0_3 = arith.constant 0 : index
    %c0_4 = arith.constant 0 : index
    %c0_5 = arith.constant 0 : index
    %2 = vector.load %arg4[%c0_3, %c0_4, %c0_5] : memref<2x16x16xi8, #tpu.memory_space<vmem>>, vector<1x16x16xi8>
    %3 = vector.shape_cast %2 : vector<1x16x16xi8> to vector<16x16xi8>
    %4 = arith.sitofp %3 : vector<16x16xi8> to vector<16x16xbf16>
    %cst = arith.constant dense<0.000000e+00> : vector<32x16xf32>
    %5 = tpu.matmul %0, %4, %cst {dimension_numbers = #tpu.dot_dimension_numbers<[1], [0], [0], [1], [0, 0, 1, 1], [], []>} : vector<32x16xbf16>, vector<16x16xbf16>, vector<32x16xf32> -> vector<32x16xf32>
    %6 = arith.truncf %5 : vector<32x16xf32> to vector<32x16xbf16>
    %cst_6 = arith.constant dense<0.000000e+00> : vector<32x32xf32>
    %7 = tpu.matmul %6, %1, %cst_6 {dimension_numbers = #tpu.dot_dimension_numbers<[1], [0], [0], [1], [0, 0, 1, 1], [], []>} : vector<32x16xbf16>, vector<16x32xbf16>, vector<32x32xf32> -> vector<32x32xf32>
    %cst_7 = arith.constant 5.000000e-01 : f32
    %8 = vector.broadcast %cst_7 : f32 to vector<32x32xf32>
    %9 = arith.cmpf ogt, %7, %8 : vector<32x32xf32>
    %10 = arith.extui %9 : vector<32x32xi1> to vector<32x32xi8>
    %c0_8 = arith.constant 0 : index
    %c0_9 = arith.constant 0 : index
    %c0_10 = arith.constant 0 : index
    %11 = vector.load %arg5[%c0_8, %c0_9, %c0_10] : memref<2x32x32xi8, #tpu.memory_space<vmem>>, vector<1x32x32xi8>
    %12 = vector.shape_cast %11 : vector<1x32x32xi8> to vector<32x32xi8>
    %13 = vector.shape_cast %10 : vector<32x32xi8> to vector<1x32x32xi8>
    tpu.vector_store %arg5[%c0_8, %c0_9, %c0_10], %13 {strides = array<i32>} : memref<2x32x32xi8, #tpu.memory_space<vmem>>, vector<1x32x32xi8>,
    %c1 = arith.constant 1 : index
    %c0_11 = arith.constant 0 : index
    %c0_12 = arith.constant 0 : index
    %14 = vector.load %arg4[%c1, %c0_11, %c0_12] : memref<2x16x16xi8, #tpu.memory_space<vmem>>, vector<1x16x16xi8>
    %15 = vector.shape_cast %14 : vector<1x16x16xi8> to vector<16x16xi8>
    %16 = arith.sitofp %15 : vector<16x16xi8> to vector<16x16xbf16>
    %cst_13 = arith.constant dense<0.000000e+00> : vector<32x16xf32>
    %17 = tpu.matmul %0, %16, %cst_13 {dimension_numbers = #tpu.dot_dimension_numbers<[1], [0], [0], [1], [0, 0, 1, 1], [], []>} : vector<32x16xbf16>, vector<16x16xbf16>, vector<32x16xf32> -> vector<32x16xf32>
    %18 = arith.truncf %17 : vector<32x16xf32> to vector<32x16xbf16>
    %cst_14 = arith.constant dense<0.000000e+00> : vector<32x32xf32>
    %19 = tpu.matmul %18, %1, %cst_14 {dimension_numbers = #tpu.dot_dimension_numbers<[1], [0], [0], [1], [0, 0, 1, 1], [], []>} : vector<32x16xbf16>, vector<16x32xbf16>, vector<32x32xf32> -> vector<32x32xf32>
    %cst_15 = arith.constant 5.000000e-01 : f32
    %20 = vector.broadcast %cst_15 : f32 to vector<32x32xf32>
    %21 = arith.cmpf ogt, %19, %20 : vector<32x32xf32>
    %22 = arith.extui %21 : vector<32x32xi1> to vector<32x32xi8>
    %c1_16 = arith.constant 1 : index
    %c0_17 = arith.constant 0 : index
    %c0_18 = arith.constant 0 : index
    %23 = vector.load %arg5[%c1_16, %c0_17, %c0_18] : memref<2x32x32xi8, #tpu.memory_space<vmem>>, vector<1x32x32xi8>
    %24 = vector.shape_cast %23 : vector<1x32x32xi8> to vector<32x32xi8>
    %25 = vector.shape_cast %22 : vector<32x32xi8> to vector<1x32x32xi8>
    tpu.vector_store %arg5[%c1_16, %c0_17, %c0_18], %25 {strides = array<i32>} : memref<2x32x32xi8, #tpu.memory_space<vmem>>, vector<1x32x32xi8>,
    return
  }
  func.func @transform_0(%arg0: i32, %arg1: i32) -> (i32, i32) {
    %c0_i32 = arith.constant 0 : i32
    %c0_i32_0 = arith.constant 0 : i32
    return %arg1, %c0_i32 : i32, i32
  }
  func.func @transform_1(%arg0: i32, %arg1: i32) -> (i32, i32) {
    %c0_i32 = arith.constant 0 : i32
    %c0_i32_0 = arith.constant 0 : i32
    %c0_i32_1 = arith.constant 0 : i32
    return %c0_i32, %c0_i32_0 : i32, i32
  }
  func.func @transform_2(%arg0: i32, %arg1: i32) -> (i32, i32, i32) {
    %c0_i32 = arith.constant 0 : i32
    %c0_i32_0 = arith.constant 0 : i32
    %c0_i32_1 = arith.constant 0 : i32
    return %arg0, %c0_i32, %c0_i32_0 : i32, i32, i32
  }
  func.func @transform_3(%arg0: i32, %arg1: i32) -> (i32, i32, i32) {
    %c0_i32 = arith.constant 0 : i32
    %c0_i32_0 = arith.constant 0 : i32
    return %arg0, %arg1, %c0_i32 : i32, i32, i32
  }
}

</mosaic_0001>

<llo_original>
// kernel: tpu_custom_call.1
$region0: #{tpu_custom_call.1}
  #allocation0 [shape = 'u32[]', space=smem, size = 0x4, offset = 0x4, fixed_abs, tag = 'smem constant byte address 0x4 - core index']
  #allocation1 [shape = 'u32[144,128]{1,0:T(1,128)}', space=vmem, size = 0x12000, scoped, tag = 'internal scratch']
  %s0 = inlined_call_operand.vmem [shape: bf16[8,8], index: 0, kind: input, shape index: {}]
  %s1 = inlined_call_operand.hbm [shape: bf16[128,128], index: 1, kind: input, shape index: {}]
  %s2 = inlined_call_operand.vmem [shape: s32[1,8,128], index: 2, kind: input, shape index: {}]
  %s3 = inlined_call_operand.vmem [shape: s32[1,8,128], index: 3, kind: output, shape index: {}]
  %s4 = sld [smem:[#allocation0]]
  $region26: #{tpu_custom_call.1} parent=0
    _
  %s6 = ssub.s32 1, %s4
  %s7 = scalar_select 0, %s6, %s4
  $region1: #{tpu_custom_call.1} parent=0
    #allocation2 [shape = 'u8[32768]{0}', space=vmem, size = 0x8000, scoped, tag = 'input window, operand 1, single buffered']
    #allocation3 [shape = 's32[1]{0}', space=sflag, size = 0x4, scoped, tag = 'scoped memory for tpu_custom_call.1']
    %8 = vsyncpa [#allocation3], 0
    // Predicated region
    $region2: #{tpu_custom_call.1} parent=1 // pred_check
      _
    $region3: #{tpu_custom_call.1} parent=1 // pred_check_branch
      %10 = sbr.rel (0) target = $region5
    $region4: #{tpu_custom_call.1} parent=1 // pred_region
      _
    $region5: #{tpu_custom_call.1} parent=1 // pred_fallthru
      _
    // Predicated region
    $region6: #{tpu_custom_call.1} parent=1 // pred_check
      _
    $region7: #{tpu_custom_call.1} parent=1 // pred_check_branch
      %12 = sbr.rel (0) target = $region9
    $region8: #{tpu_custom_call.1} parent=1 // pred_region
      %s14 = ssub.s32 1024, 1024
      %15 = vsyncadd [#allocation3], %s14
      %s16 = sshll.u32 [#allocation2], 4
      %s17 = int_to_ptr.vmem [resolvable:$true] %s16
      %22 = dma.hbm_to_vmem [thread:$0]  %s1, 1024, %s17, [#allocation3], 64, 64, 4
    $region9: #{tpu_custom_call.1} parent=1 // pred_fallthru
      _
    // Predicated region
    $region10: #{tpu_custom_call.1} parent=1 // pred_check
      _
    $region11: #{tpu_custom_call.1} parent=1 // pred_check_branch
      %24 = sbr.rel (0) target = $region13
    $region12: #{tpu_custom_call.1} parent=1 // pred_region
      _
    $region13: #{tpu_custom_call.1} parent=1 // pred_fallthru
      _
    // Predicated region
    $region14: #{tpu_custom_call.1} parent=1 // pred_check
      _
    $region15: #{tpu_custom_call.1} parent=1 // pred_check_branch
      %26 = sbr.rel (0) target = $region17
    $region16: #{tpu_custom_call.1} parent=1 // pred_region
      %27 = dma.done [#allocation3], 1024
    $region17: #{tpu_custom_call.1} parent=1 // pred_fallthru
      _
    %v29 = vld [vmem:[%s0] sm:$0xf]
    %v30 = vld [vmem:[#allocation2] sm:$0xf]
    %v31 = vld [vmem:[#allocation2 + $0x4] sm:$0xf]
    %v32 = vld [vmem:[#allocation2 + $0x8] sm:$0xf]
    %v33 = vld [vmem:[#allocation2 + $0xc] sm:$0xf]
    %v34 = vld [vmem:[#allocation2 + $0x10] sm:$0xf]
    %v35 = vld [vmem:[#allocation2 + $0x14] sm:$0xf]
    %v36 = vld [vmem:[#allocation2 + $0x18] sm:$0xf]
    %v37 = vld [vmem:[#allocation2 + $0x1c] sm:$0xf]
    %v38 = vld [vmem:[#allocation2 + $0x20] sm:$0xf]
    %v39 = vld [vmem:[#allocation2 + $0x24] sm:$0xf]
    %v40 = vld [vmem:[#allocation2 + $0x28] sm:$0xf]
    %v41 = vld [vmem:[#allocation2 + $0x2c] sm:$0xf]
    %v42 = vld [vmem:[#allocation2 + $0x30] sm:$0xf]
    %v43 = vld [vmem:[#allocation2 + $0x34] sm:$0xf]
    %v44 = vld [vmem:[#allocation2 + $0x38] sm:$0xf]
    %v45 = vld [vmem:[#allocation2 + $0x3c] sm:$0xf]
    %v46 = vld [vmem:[%s2] sm:$0xff]
    %vm47 = vcmp.ne.s32.totalorder %v46, 0
    %v48 = vsel %vm47, 1, 0
    %v49 = vcvt.s32.f32 %v48
    %v50 = vpack.c.bf16 %v49, %v49
    %vm51 = vcmask 64512
    %v53 = vsel %vm51, %v29, 0
    %vm55 = vcmask 1043456
    %v57 = vsel %vm55, %v50, 0
    %59 = vmatprep.subr.bf16.mxu0 0
    %60 = vmatpush1.bf16.msra.mxu0 %v57
    %61 = vmatprep.subr.bf16.mxu0 0
    %62 = vmatpush1.bf16.msra.mxu0 0
    %63 = vmatprep.subr.bf16.mxu0 0
    %64 = vmatpush1.bf16.msra.mxu0 0
    %65 = vmatprep.subr.bf16.mxu0 0
    %66 = vmatpush1.bf16.msra.mxu0 0
    %67 = vmatprep.subr.bf16.mxu0 0
    %68 = vmatpush1.bf16.msra.mxu0 0
    %69 = vmatprep.subr.bf16.mxu0 0
    %70 = vmatpush1.bf16.msra.mxu0 0
    %71 = vmatprep.subr.bf16.mxu0 0
    %72 = vmatpush1.bf16.msra.mxu0 0
    %73 = vmatprep.subr.bf16.mxu0 0
    %74 = vmatpush1.bf16.msra.mxu0 0
    %75 = vmatprep.subr.bf16.mxu0 0
    %76 = vmatpush1.bf16.msra.mxu0 0
    %77 = vmatprep.subr.bf16.mxu0 0
    %78 = vmatpush1.bf16.msra.mxu0 0
    %79 = vmatprep.subr.bf16.mxu0 0
    %80 = vmatpush1.bf16.msra.mxu0 0
    %81 = vmatprep.subr.bf16.mxu0 0
    %82 = vmatpush1.bf16.msra.mxu0 0
    %83 = vmatprep.subr.bf16.mxu0 0
    %84 = vmatpush1.bf16.msra.mxu0 0
    %85 = vmatprep.subr.bf16.mxu0 0
    %86 = vmatpush1.bf16.msra.mxu0 0
    %87 = vmatprep.subr.bf16.mxu0 0
    %88 = vmatpush1.bf16.msra.mxu0 0
    %89 = vmatprep.subr.bf16.mxu0 0
    %90 = vmatpush1.bf16.msra.mxu0 0
    %91 = vmatprep.mubr.bf16.mxu0 0
    %92 = vmatmul.mubr.bf16.gmra.mrb[0].mxu0 %v53
    %v93 = vpop.f32.mrb[0].mxu0
    %v94 = vadd.f32 0.0, %v93
    %v95 = vpop.f32.mrb[0].mxu0
    %v96 = vpop.f32.mrb[0].mxu0
    %v97 = vpop.f32.mrb[0].mxu0
    %98 = vdwg.mxu0
    %v99 = vpack.c.bf16 %v94, %v94
    %v116 = vunpack.c.l.b16 %v30
    %v117 = vunpack.c.l.b16 %v31
    %v118 = vunpack.c.l.b16 %v32
    %v119 = vunpack.c.l.b16 %v33
    %v120 = vunpack.c.l.b16 %v34
    %v121 = vunpack.c.l.b16 %v35
    %v122 = vunpack.c.l.b16 %v36
    %v123 = vunpack.c.l.b16 %v37
    %v124 = vunpack.c.l.b16 %v38
    %v125 = vunpack.c.l.b16 %v39
    %v126 = vunpack.c.l.b16 %v40
    %v127 = vunpack.c.l.b16 %v41
    %v128 = vunpack.c.l.b16 %v42
    %v129 = vunpack.c.l.b16 %v43
    %v130 = vunpack.c.l.b16 %v44
    %v131 = vunpack.c.l.b16 %v45
    %v132 = vpack.c.b16 %v117, %v116
    %v133 = vpack.c.b16 %v119, %v118
    %v134 = vpack.c.b16 %v121, %v120
    %v135 = vpack.c.b16 %v123, %v122
    %v136 = vpack.c.b16 %v125, %v124
    %v137 = vpack.c.b16 %v127, %v126
    %v138 = vpack.c.b16 %v129, %v128
    %v139 = vpack.c.b16 %v131, %v130
    %148 = vmatprep.subr.bf16.mxu0 0
    %149 = vmatpush1.bf16.msra.mxu0 %v132
    %150 = vmatprep.subr.bf16.mxu0 0
    %151 = vmatpush1.bf16.msra.mxu0 %v133
    %152 = vmatprep.subr.bf16.mxu0 0
    %153 = vmatpush1.bf16.msra.mxu0 %v134
    %154 = vmatprep.subr.bf16.mxu0 0
    %155 = vmatpush1.bf16.msra.mxu0 %v135
    %156 = vmatprep.subr.bf16.mxu0 0
    %157 = vmatpush1.bf16.msra.mxu0 %v136
    %158 = vmatprep.subr.bf16.mxu0 0
    %159 = vmatpush1.bf16.msra.mxu0 %v137
    %160 = vmatprep.subr.bf16.mxu0 0
    %161 = vmatpush1.bf16.msra.mxu0 %v138
    %162 = vmatprep.subr.bf16.mxu0 0
    %163 = vmatpush1.bf16.msra.mxu0 %v139
    %164 = vmatprep.subr.bf16.mxu0 0
    %165 = vmatpush1.bf16.msra.mxu0 0
    %166 = vmatprep.subr.bf16.mxu0 0
    %167 = vmatpush1.bf16.msra.mxu0 0
    %168 = vmatprep.subr.bf16.mxu0 0
    %169 = vmatpush1.bf16.msra.mxu0 0
    %170 = vmatprep.subr.bf16.mxu0 0
    %171 = vmatpush1.bf16.msra.mxu0 0
    %172 = vmatprep.subr.bf16.mxu0 0
    %173 = vmatpush1.bf16.msra.mxu0 0
    %174 = vmatprep.subr.bf16.mxu0 0
    %175 = vmatpush1.bf16.msra.mxu0 0
    %176 = vmatprep.subr.bf16.mxu0 0
    %177 = vmatpush1.bf16.msra.mxu0 0
    %178 = vmatprep.subr.bf16.mxu0 0
    %179 = vmatpush1.bf16.msra.mxu0 0
    %180 = vmatprep.mubr.bf16.mxu0 0
    %181 = vmatmul.mubr.bf16.gmra.mrb[0].mxu0 %v99
    %v182 = vpop.f32.mrb[0].mxu0
    %v183 = vadd.f32 0.0, %v182
    %v184 = vpop.f32.mrb[0].mxu0
    %v185 = vpop.f32.mrb[0].mxu0
    %v186 = vpop.f32.mrb[0].mxu0
    %187 = vdwg.mxu0
    %vm188 = vcmp.gt.f32.partialorder %v183, 0.5
    %v189 = vsel %vm188, 1, 0
    %190 = vst [vmem:[%s3] sm:$0xff] %v189
    // Predicated region
    $region18: #{tpu_custom_call.1} parent=1 // pred_check
      _
    $region19: #{tpu_custom_call.1} parent=1 // pred_check_branch
      %192 = sbr.rel (0) target = $region21
    $region20: #{tpu_custom_call.1} parent=1 // pred_region
      _
    $region21: #{tpu_custom_call.1} parent=1 // pred_fallthru
      _
    // Predicated region
    $region22: #{tpu_custom_call.1} parent=1 // pred_check
      _
    $region23: #{tpu_custom_call.1} parent=1 // pred_check_branch
      %194 = sbr.rel (0) target = $region25
    $region24: #{tpu_custom_call.1} parent=1 // pred_region
      _
    $region25: #{tpu_custom_call.1} parent=1 // pred_fallthru
      _
    %195 = vsyncpa [#allocation3], 1

// kernel: tpu_custom_call.1
$region0: #{tpu_custom_call.1}
  #allocation0 [shape = 'u32[]', space=smem, size = 0x4, offset = 0x4, fixed_abs, tag = 'smem constant byte address 0x4 - core index']
  #allocation1 [shape = 'u32[144,128]{1,0:T(1,128)}', space=vmem, size = 0x12000, scoped, tag = 'internal scratch']
  %s0 = inlined_call_operand.vmem [shape: bf16[32,16], index: 0, kind: input, shape index: {}]
  %s1 = inlined_call_operand.vmem [shape: bf16[16,32], index: 1, kind: input, shape index: {}]
  %s2 = inlined_call_operand.vmem [shape: s8[2,16,16], index: 2, kind: input, shape index: {}]
  %s3 = inlined_call_operand.hbm [shape: s8[2,32,32], index: 3, kind: output, shape index: {}]
  %s4 = sld [smem:[#allocation0]]
  $region22: #{tpu_custom_call.1} parent=0
    _
  %s6 = ssub.s32 1, %s4
  %s7 = scalar_select 0, %s6, %s4
  $region1: #{tpu_custom_call.1} parent=0
    #allocation2 [shape = 'u8[8192]{0}', space=vmem, size = 0x2000, scoped, tag = 'output window, operand 0, single buffered']
    #allocation3 [shape = 's32[1]{0}', space=sflag, size = 0x4, scoped, tag = 'scoped memory for tpu_custom_call.1']
    %8 = vsyncpa [#allocation3], 0
    // Predicated region
    $region2: #{tpu_custom_call.1} parent=1 // pred_check
      _
    $region3: #{tpu_custom_call.1} parent=1 // pred_check_branch
      %10 = sbr.rel (0) target = $region5
    $region4: #{tpu_custom_call.1} parent=1 // pred_region
      _
    $region5: #{tpu_custom_call.1} parent=1 // pred_fallthru
      _
    // Predicated region
    $region6: #{tpu_custom_call.1} parent=1 // pred_check
      _
    $region7: #{tpu_custom_call.1} parent=1 // pred_check_branch
      %12 = sbr.rel (0) target = $region9
    $region8: #{tpu_custom_call.1} parent=1 // pred_region
      _
    $region9: #{tpu_custom_call.1} parent=1 // pred_fallthru
      _
    // Predicated region
    $region10: #{tpu_custom_call.1} parent=1 // pred_check
      _
    $region11: #{tpu_custom_call.1} parent=1 // pred_check_branch
      %14 = sbr.rel (0) target = $region13
    $region12: #{tpu_custom_call.1} parent=1 // pred_region
      _
    $region13: #{tpu_custom_call.1} parent=1 // pred_fallthru
      _
    %v18 = vld [vmem:[%s0] sm:$0xf]
    %v19 = vld [vmem:[%s0 + $0x4] sm:$0xf]
    %v20 = vld [vmem:[%s0 + $0x8] sm:$0xf]
    %v21 = vld [vmem:[%s0 + $0xc] sm:$0xf]
    %v22 = vld [vmem:[%s1] sm:$0xf]
    %v23 = vld [vmem:[%s1 + $0x4] sm:$0xf]
    %v24 = vld [vmem:[%s2] sm:$0x3]
    %v25 = vld [vmem:[%s2 + $0x2] sm:$0x3]
    %v26 = vunpack.c.l.s8.bf16 %v24
    %v27 = vunpack.c.l.s8.bf16 %v25
    %v32 = vunpack.c.l.b16 %v18
    %v33 = vunpack.c.l.b16 %v19
    %v34 = vunpack.c.l.b16 %v20
    %v35 = vunpack.c.l.b16 %v21
    %v36 = vpack.c.b16 %v33, %v32
    %v37 = vpack.c.b16 %v35, %v34
    %v40 = vunpack.c.l.b16 %v26
    %v41 = vunpack.c.l.b16 %v27
    %v42 = vpack.c.b16 %v41, %v40
    %vm44 = vcmask 130048
    %v46 = vsel %vm44, %v36, 0
    %v49 = vsel %vm44, %v37, 0
    %51 = vmatprep.subr.bf16.mxu0 0
    %52 = vmatpush1.bf16.msra.mxu0 %v42
    %53 = vmatprep.subr.bf16.mxu0 0
    %54 = vmatpush1.bf16.msra.mxu0 0
    %55 = vmatprep.subr.bf16.mxu0 0
    %56 = vmatpush1.bf16.msra.mxu0 0
    %57 = vmatprep.subr.bf16.mxu0 0
    %58 = vmatpush1.bf16.msra.mxu0 0
    %59 = vmatprep.subr.bf16.mxu0 0
    %60 = vmatpush1.bf16.msra.mxu0 0
    %61 = vmatprep.subr.bf16.mxu0 0
    %62 = vmatpush1.bf16.msra.mxu0 0
    %63 = vmatprep.subr.bf16.mxu0 0
    %64 = vmatpush1.bf16.msra.mxu0 0
    %65 = vmatprep.subr.bf16.mxu0 0
    %66 = vmatpush1.bf16.msra.mxu0 0
    %67 = vmatprep.subr.bf16.mxu0 0
    %68 = vmatpush1.bf16.msra.mxu0 0
    %69 = vmatprep.subr.bf16.mxu0 0
    %70 = vmatpush1.bf16.msra.mxu0 0
    %71 = vmatprep.subr.bf16.mxu0 0
    %72 = vmatpush1.bf16.msra.mxu0 0
    %73 = vmatprep.subr.bf16.mxu0 0
    %74 = vmatpush1.bf16.msra.mxu0 0
    %75 = vmatprep.subr.bf16.mxu0 0
    %76 = vmatpush1.bf16.msra.mxu0 0
    %77 = vmatprep.subr.bf16.mxu0 0
    %78 = vmatpush1.bf16.msra.mxu0 0
    %79 = vmatprep.subr.bf16.mxu0 0
    %80 = vmatpush1.bf16.msra.mxu0 0
    %81 = vmatprep.subr.bf16.mxu0 0
    %82 = vmatpush1.bf16.msra.mxu0 0
    %83 = vmatprep.mubr.bf16.mxu0 0
    %84 = vmatmul.mubr.bf16.gmra.mrb[0].mxu0 %v46
    %v85 = vpop.f32.mrb[0].mxu0
    %v86 = vadd.f32 0.0, %v85
    %v87 = vpop.f32.mrb[0].mxu0
    %v88 = vpop.f32.mrb[0].mxu0
    %v89 = vadd.f32 0.0, %v88
    %v90 = vpop.f32.mrb[0].mxu0
    %91 = vmatprep.mubr.bf16.mxu0 0
    %92 = vmatmul.mubr.bf16.gmra.mrb[0].mxu0 %v49
    %v93 = vpop.f32.mrb[0].mxu0
    %v94 = vadd.f32 0.0, %v93
    %v95 = vpop.f32.mrb[0].mxu0
    %v96 = vpop.f32.mrb[0].mxu0
    %v97 = vadd.f32 0.0, %v96
    %v98 = vpop.f32.mrb[0].mxu0
    %99 = vdwg.mxu0
    %v100 = vpack.c.bf16 %v89, %v86
    %v101 = vpack.c.bf16 %v97, %v94
    %v104 = vunpack.c.l.b16 %v22
    %v105 = vunpack.c.l.b16 %v23
    %v106 = vpack.c.b16 %v105, %v104
    %v109 = vsel %vm44, %v100, 0
    %v112 = vsel %vm44, %v101, 0
    %114 = vmatprep.subr.bf16.mxu0 0
    %115 = vmatpush1.bf16.msra.mxu0 %v106
    %116 = vmatprep.subr.bf16.mxu0 0
    %117 = vmatpush1.bf16.msra.mxu0 0
    %118 = vmatprep.subr.bf16.mxu0 0
    %119 = vmatpush1.bf16.msra.mxu0 0
    %120 = vmatprep.subr.bf16.mxu0 0
    %121 = vmatpush1.bf16.msra.mxu0 0
    %122 = vmatprep.subr.bf16.mxu0 0
    %123 = vmatpush1.bf16.msra.mxu0 0
    %124 = vmatprep.subr.bf16.mxu0 0
    %125 = vmatpush1.bf16.msra.mxu0 0
    %126 = vmatprep.subr.bf16.mxu0 0
    %127 = vmatpush1.bf16.msra.mxu0 0
    %128 = vmatprep.subr.bf16.mxu0 0
    %129 = vmatpush1.bf16.msra.mxu0 0
    %130 = vmatprep.subr.bf16.mxu0 0
    %131 = vmatpush1.bf16.msra.mxu0 0
    %132 = vmatprep.subr.bf16.mxu0 0
    %133 = vmatpush1.bf16.msra.mxu0 0
    %134 = vmatprep.subr.bf16.mxu0 0
    %135 = vmatpush1.bf16.msra.mxu0 0
    %136 = vmatprep.subr.bf16.mxu0 0
    %137 = vmatpush1.bf16.msra.mxu0 0
    %138 = vmatprep.subr.bf16.mxu0 0
    %139 = vmatpush1.bf16.msra.mxu0 0
    %140 = vmatprep.subr.bf16.mxu0 0
    %141 = vmatpush1.bf16.msra.mxu0 0
    %142 = vmatprep.subr.bf16.mxu0 0
    %143 = vmatpush1.bf16.msra.mxu0 0
    %144 = vmatprep.subr.bf16.mxu0 0
    %145 = vmatpush1.bf16.msra.mxu0 0
    %146 = vmatprep.mubr.bf16.mxu0 0
    %147 = vmatmul.mubr.bf16.gmra.mrb[0].mxu0 %v109
    %v148 = vpop.f32.mrb[0].mxu0
    %v149 = vadd.f32 0.0, %v148
    %v150 = vpop.f32.mrb[0].mxu0
    %v151 = vpop.f32.mrb[0].mxu0
    %v152 = vadd.f32 0.0, %v151
    %v153 = vpop.f32.mrb[0].mxu0
    %154 = vmatprep.mubr.bf16.mxu0 0
    %155 = vmatmul.mubr.bf16.gmra.mrb[0].mxu0 %v112
    %v156 = vpop.f32.mrb[0].mxu0
    %v157 = vadd.f32 0.0, %v156
    %v158 = vpop.f32.mrb[0].mxu0
    %v159 = vpop.f32.mrb[0].mxu0
    %v160 = vadd.f32 0.0, %v159
    %v161 = vpop.f32.mrb[0].mxu0
    %162 = vdwg.mxu0
    %vm163 = vcmp.gt.f32.partialorder %v149, 0.5
    %vm164 = vcmp.gt.f32.partialorder %v152, 0.5
    %vm165 = vcmp.gt.f32.partialorder %v157, 0.5
    %vm166 = vcmp.gt.f32.partialorder %v160, 0.5
    %vm167 = vmpackc.low %vm164, %vm163
    %vm168 = vmpackc.low %vm166, %vm165
    %vm169 = vmpackc.even %vm168, %vm167
    %v170 = vsel %vm169, 16843009, 0
    %vm171 = vcmask 261120
    %172 = vst.msk [vmem:[#allocation2] sm:$0xff] %vm171, %v170
    %s173 = scalar_lea.vmem %s2, 4
    %v174 = vld [vmem:[%s173] sm:$0x3]
    %v175 = vld [vmem:[%s173 + $0x2] sm:$0x3]
    %v176 = vunpack.c.l.s8.bf16 %v174
    %v177 = vunpack.c.l.s8.bf16 %v175
    %v180 = vunpack.c.l.b16 %v176
    %v181 = vunpack.c.l.b16 %v177
    %v182 = vpack.c.b16 %v181, %v180
    %184 = vmatprep.subr.bf16.mxu0 0
    %185 = vmatpush1.bf16.msra.mxu0 %v182
    %186 = vmatprep.subr.bf16.mxu0 0
    %187 = vmatpush1.bf16.msra.mxu0 0
    %188 = vmatprep.subr.bf16.mxu0 0
    %189 = vmatpush1.bf16.msra.mxu0 0
    %190 = vmatprep.subr.bf16.mxu0 0
    %191 = vmatpush1.bf16.msra.mxu0 0
    %192 = vmatprep.subr.bf16.mxu0 0
    %193 = vmatpush1.bf16.msra.mxu0 0
    %194 = vmatprep.subr.bf16.mxu0 0
    %195 = vmatpush1.bf16.msra.mxu0 0
    %196 = vmatprep.subr.bf16.mxu0 0
    %197 = vmatpush1.bf16.msra.mxu0 0
    %198 = vmatprep.subr.bf16.mxu0 0
    %199 = vmatpush1.bf16.msra.mxu0 0
    %200 = vmatprep.subr.bf16.mxu0 0
    %201 = vmatpush1.bf16.msra.mxu0 0
    %202 = vmatprep.subr.bf16.mxu0 0
    %203 = vmatpush1.bf16.msra.mxu0 0
    %204 = vmatprep.subr.bf16.mxu0 0
    %205 = vmatpush1.bf16.msra.mxu0 0
    %206 = vmatprep.subr.bf16.mxu0 0
    %207 = vmatpush1.bf16.msra.mxu0 0
    %208 = vmatprep.subr.bf16.mxu0 0
    %209 = vmatpush1.bf16.msra.mxu0 0
    %210 = vmatprep.subr.bf16.mxu0 0
    %211 = vmatpush1.bf16.msra.mxu0 0
    %212 = vmatprep.subr.bf16.mxu0 0
    %213 = vmatpush1.bf16.msra.mxu0 0
    %214 = vmatprep.subr.bf16.mxu0 0
    %215 = vmatpush1.bf16.msra.mxu0 0
    %216 = vmatprep.mubr.bf16.mxu0 0
    %217 = vmatmul.mubr.bf16.gmra.mrb[0].mxu0 %v46
    %v218 = vpop.f32.mrb[0].mxu0
    %v219 = vadd.f32 0.0, %v218
    %v220 = vpop.f32.mrb[0].mxu0
    %v221 = vpop.f32.mrb[0].mxu0
    %v222 = vadd.f32 0.0, %v221
    %v223 = vpop.f32.mrb[0].mxu0
    %224 = vmatprep.mubr.bf16.mxu0 0
    %225 = vmatmul.mubr.bf16.gmra.mrb[0].mxu0 %v49
    %v226 = vpop.f32.mrb[0].mxu0
    %v227 = vadd.f32 0.0, %v226
    %v228 = vpop.f32.mrb[0].mxu0
    %v229 = vpop.f32.mrb[0].mxu0
    %v230 = vadd.f32 0.0, %v229
    %v231 = vpop.f32.mrb[0].mxu0
    %232 = vdwg.mxu0
    %v233 = vpack.c.bf16 %v222, %v219
    %v234 = vpack.c.bf16 %v230, %v227
    %v236 = vsel %vm44, %v233, 0
    %v239 = vsel %vm44, %v234, 0
    %241 = vmatprep.subr.bf16.mxu0 0
    %242 = vmatpush1.bf16.msra.mxu0 %v106
    %243 = vmatprep.subr.bf16.mxu0 0
    %244 = vmatpush1.bf16.msra.mxu0 0
    %245 = vmatprep.subr.bf16.mxu0 0
    %246 = vmatpush1.bf16.msra.mxu0 0
    %247 = vmatprep.subr.bf16.mxu0 0
    %248 = vmatpush1.bf16.msra.mxu0 0
    %249 = vmatprep.subr.bf16.mxu0 0
    %250 = vmatpush1.bf16.msra.mxu0 0
    %251 = vmatprep.subr.bf16.mxu0 0
    %252 = vmatpush1.bf16.msra.mxu0 0
    %253 = vmatprep.subr.bf16.mxu0 0
    %254 = vmatpush1.bf16.msra.mxu0 0
    %255 = vmatprep.subr.bf16.mxu0 0
    %256 = vmatpush1.bf16.msra.mxu0 0
    %257 = vmatprep.subr.bf16.mxu0 0
    %258 = vmatpush1.bf16.msra.mxu0 0
    %259 = vmatprep.subr.bf16.mxu0 0
    %260 = vmatpush1.bf16.msra.mxu0 0
    %261 = vmatprep.subr.bf16.mxu0 0
    %262 = vmatpush1.bf16.msra.mxu0 0
    %263 = vmatprep.subr.bf16.mxu0 0
    %264 = vmatpush1.bf16.msra.mxu0 0
    %265 = vmatprep.subr.bf16.mxu0 0
    %266 = vmatpush1.bf16.msra.mxu0 0
    %267 = vmatprep.subr.bf16.mxu0 0
    %268 = vmatpush1.bf16.msra.mxu0 0
    %269 = vmatprep.subr.bf16.mxu0 0
    %270 = vmatpush1.bf16.msra.mxu0 0
    %271 = vmatprep.subr.bf16.mxu0 0
    %272 = vmatpush1.bf16.msra.mxu0 0
    %273 = vmatprep.mubr.bf16.mxu0 0
    %274 = vmatmul.mubr.bf16.gmra.mrb[0].mxu0 %v236
    %v275 = vpop.f32.mrb[0].mxu0
    %v276 = vadd.f32 0.0, %v275
    %v277 = vpop.f32.mrb[0].mxu0
    %v278 = vpop.f32.mrb[0].mxu0
    %v279 = vadd.f32 0.0, %v278
    %v280 = vpop.f32.mrb[0].mxu0
    %281 = vmatprep.mubr.bf16.mxu0 0
    %282 = vmatmul.mubr.bf16.gmra.mrb[0].mxu0 %v239
    %v283 = vpop.f32.mrb[0].mxu0
    %v284 = vadd.f32 0.0, %v283
    %v285 = vpop.f32.mrb[0].mxu0
    %v286 = vpop.f32.mrb[0].mxu0
    %v287 = vadd.f32 0.0, %v286
    %v288 = vpop.f32.mrb[0].mxu0
    %289 = vdwg.mxu0
    %vm290 = vcmp.gt.f32.partialorder %v276, 0.5
    %vm291 = vcmp.gt.f32.partialorder %v279, 0.5
    %vm292 = vcmp.gt.f32.partialorder %v284, 0.5
    %vm293 = vcmp.gt.f32.partialorder %v287, 0.5
    %vm294 = vmpackc.low %vm291, %vm290
    %vm295 = vmpackc.low %vm293, %vm292
    %vm296 = vmpackc.even %vm295, %vm294
    %v297 = vsel %vm296, 16843009, 0
    %s298 = scalar_lea.vmem [#allocation2], 8
    %299 = vst.msk [vmem:[%s298] sm:$0xff] %vm171, %v297
    // Predicated region
    $region14: #{tpu_custom_call.1} parent=1 // pred_check
      _
    $region15: #{tpu_custom_call.1} parent=1 // pred_check_branch
      %301 = sbr.rel (0) target = $region17
    $region16: #{tpu_custom_call.1} parent=1 // pred_region
      %s303 = ssub.s32 256, 256
      %304 = vsyncadd [#allocation3], %s303
      %s305 = sshll.u32 [#allocation2], 4
      %s306 = int_to_ptr.vmem [resolvable:$true] %s305
      %311 = dma.vmem_to_hbm [thread:$0]  %s306, 256, %s3, [#allocation3], 128, 128, 8
    $region17: #{tpu_custom_call.1} parent=1 // pred_fallthru
      _
    // Predicated region
    $region18: #{tpu_custom_call.1} parent=1 // pred_check
      _
    $region19: #{tpu_custom_call.1} parent=1 // pred_check_branch
      %313 = sbr.rel (0) target = $region21
    $region20: #{tpu_custom_call.1} parent=1 // pred_region
      %314 = dma.done [#allocation3], 256
    $region21: #{tpu_custom_call.1} parent=1 // pred_fallthru
      _
    %315 = vsyncpa [#allocation3], 1

</llo_original>
